<compile_context>
chip_gen: v5e
topology: v5e:2x2
jax: 0.10.0
libtpu: 0.0.40
codegen_flags: <defaults>
</compile_context>

<pallas_src>
import functools

import jax
import jax.numpy as jnp
from jax import lax
from jax.experimental import pallas as pl
from jax.experimental.pallas import tpu as pltpu


# ---------------------------------------------------------------------------
# Tiling / VMEM policy helpers
# ---------------------------------------------------------------------------
def _choose_hw_tile(bytes_per_lane, hw, target_bytes=4 << 20, max_bytes=8 << 20):
    """Byte-targeted lane (HW) tile: ~2-8 MB of streamed data per grid step so
    DMA runs near the HBM roofline; multiple of 128 (or the full extent)."""
    if hw * bytes_per_lane <= max_bytes or hw < 256:
        return int(hw)
    thw = (target_bytes // bytes_per_lane) // 128 * 128
    cap = (max_bytes // bytes_per_lane) // 128 * 128
    thw = max(128, min(thw, cap, (hw // 128) * 128))
    return int(thw)


def _choose_divisor_tile(n, max_tile):
    """Largest tile <= max_tile dividing n and a multiple of 128 (else n)."""
    if n <= max_tile:
        return n
    t = max_tile - (max_tile % 128)
    while t >= 128:
        if n % t == 0:
            return t
        t -= 128
    return n


def _compiler_params(semantics, live_block_bytes):
    """dimension_semantics + explicit VMEM budget: 2x (double buffer) the big
    streamed blocks + headroom, clamped between v5e's 16 MiB scoped default
    and below v7x's 64 MiB physical VMEM."""
    vmem = int(min(56 << 20, max(24 << 20, 2 * live_block_bytes + (4 << 20))))
    return pltpu.CompilerParams(dimension_semantics=semantics,
                                vmem_limit_bytes=vmem)


# ---------------------------------------------------------------------------
# Kernel 1: fused per-batch centered Grams of BOTH c and s + style mean.
#   gram = Cov(t) accumulated against a proxy mean (first-tile mean) so that
#   (t't'^T - s's'^T/HW)/HW does not suffer catastrophic cancellation.
# ---------------------------------------------------------------------------
def _center_gram_pair_kernel(c_ref, s_ref, gram2_ref, smean_ref,
                             sum_c, ttT_c, shift_c, sum_s, ttT_s, shift_s,
                             *, hw, thw):
    j = pl.program_id(1)
    if hw % thw != 0:  # cdiv grid: mask padded lanes of the last partial tile
        lane = lax.broadcasted_iota(jnp.int32, (c_ref.shape[0], thw), 1)
        mask = (j * thw + lane) < hw
    else:
        mask = None

    def accumulate(t_ref, sum_sc, ttT_sc, shift_sc):
        t = t_ref[...]                                         # (C, thw)

        @pl.when(j == 0)
        def _init():
            sum_sc[...] = jnp.zeros_like(sum_sc)
            ttT_sc[...] = jnp.zeros_like(ttT_sc)
            # proxy per-channel mean from the first (always full) tile
            shift_sc[...] = jnp.sum(t.astype(jnp.float32), axis=-1,
                                    keepdims=True) * (1.0 / thw)

        tc = t - shift_sc[...].astype(t.dtype)                 # ~centered
        if mask is not None:
            tc = jnp.where(mask, tc, jnp.zeros_like(tc))
        sum_sc[...] += jnp.sum(tc.astype(jnp.float32), axis=-1, keepdims=True)
        ttT_sc[...] += lax.dot_general(                        # tc @ tc^T
            tc, tc, (((1,), (1,)), ((), ())),
            preferred_element_type=jnp.float32)

    accumulate(c_ref, sum_c, ttT_c, shift_c)
    accumulate(s_ref, sum_s, ttT_s, shift_s)

    @pl.when(j == pl.num_programs(1) - 1)
    def _finalize():
        inv_hw = 1.0 / hw

        def gram_of(sum_sc, ttT_sc):
            sv = sum_sc[...]                                   # (C, 1)
            outer = lax.dot_general(sv, sv, (((1,), (1,)), ((), ())),
                                    preferred_element_type=jnp.float32)
            return (ttT_sc[...] - outer * inv_hw) * inv_hw

        gram2_ref[0, :, :] = gram_of(sum_c, ttT_c)
        gram2_ref[1, :, :] = gram_of(sum_s, ttT_s)
        smean_ref[...] = shift_s[...] + sum_s[...] * inv_hw


def center_gram_pair(c_flat, s_flat):
    """c_flat, s_flat: (B, C, HW) -> gram2 (2, B, C, C) f32, s_mean (B, C, 1) f32."""
    B, C, HW = c_flat.shape
    bytes_per_lane = C * (c_flat.dtype.itemsize + s_flat.dtype.itemsize)
    thw = _choose_hw_tile(bytes_per_lane, HW)
    n_hw = pl.cdiv(HW, thw)
    kernel = functools.partial(_center_gram_pair_kernel, hw=HW, thw=thw)
    return pl.pallas_call(
        kernel,
        grid=(B, n_hw),
        in_specs=[pl.BlockSpec((None, C, thw), lambda b, j: (b, 0, j)),
                  pl.BlockSpec((None, C, thw), lambda b, j: (b, 0, j))],
        out_specs=[pl.BlockSpec((2, None, C, C), lambda b, j: (0, b, 0, 0)),
                   pl.BlockSpec((None, C, 1), lambda b, j: (b, 0, 0))],
        out_shape=(jax.ShapeDtypeStruct((2, B, C, C), jnp.float32),
                   jax.ShapeDtypeStruct((B, C, 1), jnp.float32)),
        scratch_shapes=[pltpu.VMEM((C, 1), jnp.float32),
                        pltpu.VMEM((C, C), jnp.float32),
                        pltpu.VMEM((C, 1), jnp.float32),
                        pltpu.VMEM((C, 1), jnp.float32),
                        pltpu.VMEM((C, C), jnp.float32),
                        pltpu.VMEM((C, 1), jnp.float32)],
        compiler_params=_compiler_params(("parallel", "arbitrary"),
                                         bytes_per_lane * thw),
    )(c_flat, s_flat)


# ---------------------------------------------------------------------------
# Kernel 2: both nn.Linear(c*c, c*c) layers fused into one call.
#   Weights are pre-stacked/pre-transposed to (2, F_in, F_out) at parameter-
#   prep time (possibly bf16); the matmul itself stays f32 (weight-BW bound).
# ---------------------------------------------------------------------------
def _fc_kernel(x_ref, w_ref, b_ref, o_ref, acc_ref):
    k = pl.program_id(2)

    @pl.when(k == 0)
    def _init():
        acc_ref[...] = jnp.zeros_like(acc_ref)

    acc_ref[...] += jnp.dot(x_ref[...].astype(jnp.float32),
                            w_ref[...].astype(jnp.float32),
                            preferred_element_type=jnp.float32)

    @pl.when(k == pl.num_programs(2) - 1)
    def _finalize():
        o_ref[...] = acc_ref[...] + b_ref[...]


def fc_fused(x2, w2t, b2, *, max_out_tile=2048, max_in_tile=2048):
    """x2: (2, B, F_in) f32, w2t: (2, F_in, F_out), b2: (2, 1, F_out) f32."""
    G, B, F_in = x2.shape
    F_out = w2t.shape[2]
    tn = _choose_divisor_tile(F_out, max_out_tile)   # full F for F <= 2048
    tk = _choose_divisor_tile(F_in, max_in_tile)     # -> grid collapses to (2,1,1)
    live = tk * tn * w2t.dtype.itemsize + (B * (tk + tn) + tn) * 4
    return pl.pallas_call(
        _fc_kernel,
        grid=(G, F_out // tn, F_in // tk),
        in_specs=[pl.BlockSpec((None, B, tk), lambda g, j, k: (g, 0, k)),
                  pl.BlockSpec((None, tk, tn), lambda g, j, k: (g, k, j)),
                  pl.BlockSpec((None, 1, tn), lambda g, j, k: (g, 0, j))],
        out_specs=pl.BlockSpec((None, B, tn), lambda g, j, k: (g, 0, j)),
        out_shape=jax.ShapeDtypeStruct((G, B, F_out), jnp.float32),
        scratch_shapes=[pltpu.VMEM((B, tn), jnp.float32)],
        compiler_params=_compiler_params(("parallel", "parallel", "arbitrary"),
                                         live),
    )(x2, w2t, b2)


# ---------------------------------------------------------------------------
# Kernel 3: out_tile = (sM @ cM) @ x_tile + sMean, tiled over HW.
#   tM is recomputed per tile (negligible flops) so the HW axis is stateless
#   and both grid axes can be "parallel" (v7x megacore even for small B).
# ---------------------------------------------------------------------------
def _apply_kernel(sM_ref, cM_ref, smean_ref, x_ref, o_ref):
    tM = jnp.dot(sM_ref[...], cM_ref[...], preferred_element_type=jnp.float32)
    x = x_ref[...]
    y = jnp.dot(tM.astype(x.dtype), x, preferred_element_type=jnp.float32)
    o_ref[...] = (y + smean_ref[...]).astype(o_ref.dtype)


def apply_transform(sM, cM, s_mean, x_flat):
    B, C, HW = x_flat.shape
    out_dtype = x_flat.dtype
    bytes_per_lane = C * (x_flat.dtype.itemsize + jnp.dtype(out_dtype).itemsize)
    thw = _choose_hw_tile(bytes_per_lane, HW)
    n_hw = pl.cdiv(HW, thw)
    return pl.pallas_call(
        _apply_kernel,
        grid=(B, n_hw),
        in_specs=[pl.BlockSpec((None, C, C), lambda b, j: (b, 0, 0)),
                  pl.BlockSpec((None, C, C), lambda b, j: (b, 0, 0)),
                  pl.BlockSpec((None, C, 1), lambda b, j: (b, 0, 0)),
                  pl.BlockSpec((None, C, thw), lambda b, j: (b, 0, j))],
        out_specs=pl.BlockSpec((None, C, thw), lambda b, j: (b, 0, j)),
        out_shape=jax.ShapeDtypeStruct((B, C, HW), out_dtype),
        compiler_params=_compiler_params(("parallel", "parallel"),
                                         bytes_per_lane * thw),
    )(sM, cM, s_mean, x_flat)


# ---------------------------------------------------------------------------
# Parameter prep (one-time, outside the per-forward path) + full forward.
# ---------------------------------------------------------------------------
def prepare_params(wc, bc, ws, bs, dtype=jnp.float32):
    """Stack the two nn.Linear layers and pre-transpose to (2, F_in, F_out).
    dtype=bfloat16 halves weight HBM traffic; kernel math stays f32."""
    w2t = jnp.stack([wc.T, ws.T], axis=0).astype(dtype)          # (2, F_in, F_out)
    b2 = jnp.stack([bc, bs], axis=0)[:, None, :].astype(jnp.float32)
    return w2t, b2


def linear_matrix(c, s, x, params):
    """Forward of the PyTorch LinearMatrix module. c, s, x: (B, C, H, W)."""
    w2t, b2 = params
    B, C, H, W = c.shape
    HW = H * W
    F = C * C

    c_flat = c.reshape(B, C, HW)
    s_flat = s.reshape(B, C, HW)
    x_flat = x.reshape(B, C, HW)

    gram2, s_mean = center_gram_pair(c_flat, s_flat)   # (2,B,C,C) f32, (B,C,1) f32
    m = fc_fused(gram2.reshape(2, B, F), w2t, b2)      # (2, B, F) f32
    cM = m[0].reshape(B, C, C)
    sM = m[1].reshape(B, C, C)
    out = apply_transform(sM, cM, s_mean, x_flat)      # (B, C, HW), x.dtype
    return out.reshape(B, C, H, W)


# ---------------------------------------------------------------------------
# Pure-JAX reference (mirrors the PyTorch forward) for correctness checks.
# ---------------------------------------------------------------------------
def linear_matrix_ref(c, s, x, wc, bc, ws, bs):
    B, C, H, W = c.shape
    HW = H * W
    cf = c.reshape(B, C, HW)
    sf = s.reshape(B, C, HW)
    xf = x.reshape(B, C, HW)
    c_cent = cf - jnp.mean(cf, axis=2, keepdims=True)
    s_mean = jnp.mean(sf, axis=2, keepdims=True)
    s_cent = sf - s_mean
    gc = jnp.einsum('bci,bdi->bcd', c_cent, c_cent) / HW
    gs = jnp.einsum('bci,bdi->bcd', s_cent, s_cent) / HW
    cM = (gc.reshape(B, -1) @ wc.T + bc).reshape(B, C, C)
    sM = (gs.reshape(B, -1) @ ws.T + bs).reshape(B, C, C)
    tM = jnp.einsum('bij,bjk->bik', sM, cM)
    out = jnp.einsum('bij,bjk->bik', tM, xf) + s_mean
    return out.reshape(B, C, H, W)


if __name__ == "__main__":
    key = jax.random.PRNGKey(0)
    kc, ks, kx, kw1, kb1, kw2, kb2 = jax.random.split(key, 7)

    B, C, H, W = 2, 4, 16, 16
    F = C * C

    c = jax.random.normal(kc, (B, C, H, W), dtype=jnp.float32)
    s = jax.random.normal(ks, (B, C, H, W), dtype=jnp.float32)
    x = jax.random.normal(kx, (B, C, H, W), dtype=jnp.float32)

    # nn.Linear-style init: U(-1/sqrt(fan_in), 1/sqrt(fan_in))
    k = 1.0 / jnp.sqrt(jnp.float32(F))
    wc = jax.random.uniform(kw1, (F, F), jnp.float32, -k, k)
    bc = jax.random.uniform(kb1, (F,), jnp.float32, -k, k)
    ws = jax.random.uniform(kw2, (F, F), jnp.float32, -k, k)
    bs = jax.random.uniform(kb2, (F,), jnp.float32, -k, k)

    # f32 path: exact forward semantics of the PyTorch module.
    params = prepare_params(wc, bc, ws, bs)                      # one-time prep
    out = linear_matrix(c, s, x, params)
    jax.block_until_ready(out)
    assert out.shape == (B, C, H, W)
    ref = linear_matrix_ref(c, s, x, wc, bc, ws, bs)
    err = float(jnp.max(jnp.abs(out - ref)))
    assert err < 1e-3, f"f32 path mismatch vs reference: {err}"

    # bf16 streaming path: halves HBM traffic on the memory-bound kernels
    # (f32 accumulation).  Checked against a reference fed the same
    # bf16-quantized activations/weights.
    q16 = lambda a: a.astype(jnp.bfloat16).astype(jnp.float32)
    params16 = prepare_params(wc, bc, ws, bs, dtype=jnp.bfloat16)
    out16 = linear_matrix(c.astype(jnp.bfloat16), s.astype(jnp.bfloat16),
                          x.astype(jnp.bfloat16), params16)
    jax.block_until_ready(out16)
    ref16 = linear_matrix_ref(q16(c), q16(s), q16(x), q16(wc), bc, q16(ws), bs)
    err16 = float(jnp.max(jnp.abs(out16.astype(jnp.float32) - ref16)))
    assert err16 < 5e-2, f"bf16 path mismatch vs quantized reference: {err16}"

    print("KERNEL_OK")
</pallas_src>

<mosaic_0001>
module attributes {stable_mosaic.version = 11 : i64} {
  func.func @_center_gram_pair_kernel(%arg0: i32, %arg1: i32, %arg2: memref<1x4x256xf32, #tpu.memory_space<vmem>>, %arg3: memref<1x4x256xf32, #tpu.memory_space<vmem>>, %arg4: memref<2x1x4x4xf32, #tpu.memory_space<vmem>>, %arg5: memref<1x4x1xf32, #tpu.memory_space<vmem>>, %arg6: memref<4x1xf32, #tpu.memory_space<vmem>>, %arg7: memref<4x4xf32, #tpu.memory_space<vmem>>, %arg8: memref<4x1xf32, #tpu.memory_space<vmem>>, %arg9: memref<4x1xf32, #tpu.memory_space<vmem>>, %arg10: memref<4x4xf32, #tpu.memory_space<vmem>>, %arg11: memref<4x1xf32, #tpu.memory_space<vmem>>) attributes {dimension_semantics = [#tpu.dimension_semantics<parallel>, #tpu.dimension_semantics<arbitrary>], iteration_bounds = array<i64: 2, 1>, scalar_prefetch = 0 : i64, scratch_operands = 6 : i64, tpu.core_type = #tpu.core_type<tc>, window_params = [{transform_indices = @transform_0, window_bounds = array<i64: 1, 4, 256>}, {transform_indices = @transform_1, window_bounds = array<i64: 1, 4, 256>}, {transform_indices = @transform_2, window_bounds = array<i64: 2, 1, 4, 4>}, {transform_indices = @transform_3, window_bounds = array<i64: 1, 4, 1>}]} {
    %c0 = arith.constant 0 : index
    %c0_0 = arith.constant 0 : index
    %c0_1 = arith.constant 0 : index
    %0 = vector.load %arg2[%c0, %c0_0, %c0_1] : memref<1x4x256xf32, #tpu.memory_space<vmem>>, vector<1x4x256xf32>
    %1 = vector.shape_cast %0 : vector<1x4x256xf32> to vector<4x256xf32>
    %c0_i32 = arith.constant 0 : i32
    %2 = arith.cmpi eq, %arg1, %c0_i32 : i32
    %3 = arith.extui %2 : i1 to i32
    %c0_i32_2 = arith.constant 0 : i32
    %4 = arith.cmpi ne, %3, %c0_i32_2 : i32
    scf.if %4 {
      %cst_33 = arith.constant 0.000000e+00 : f32
      %37 = vector.broadcast %cst_33 : f32 to vector<4x1xf32>
      %c0_34 = arith.constant 0 : index
      %c0_35 = arith.constant 0 : index
      %38 = vector.load %arg6[%c0_34, %c0_35] : memref<4x1xf32, #tpu.memory_space<vmem>>, vector<4x1xf32>
      tpu.vector_store %arg6[%c0_34, %c0_35], %37 {strides = array<i32>} : memref<4x1xf32, #tpu.memory_space<vmem>>, vector<4x1xf32>,
      %cst_36 = arith.constant 0.000000e+00 : f32
      %39 = vector.broadcast %cst_36 : f32 to vector<4x4xf32>
      %c0_37 = arith.constant 0 : index
      %c0_38 = arith.constant 0 : index
      %40 = vector.load %arg7[%c0_37, %c0_38] : memref<4x4xf32, #tpu.memory_space<vmem>>, vector<4x4xf32>
      tpu.vector_store %arg7[%c0_37, %c0_38], %39 {strides = array<i32>} : memref<4x4xf32, #tpu.memory_space<vmem>>, vector<4x4xf32>,
      %cst_39 = arith.constant dense<0.000000e+00> : vector<4xf32>
      %41 = vector.multi_reduction <add>, %1, %cst_39 [1] : vector<4x256xf32> to vector<4xf32>
      %42 = vector.shape_cast %41 : vector<4xf32> to vector<4x1xf32>
      %cst_40 = arith.constant 3.906250e-03 : f32
      %43 = vector.broadcast %cst_40 : f32 to vector<4x1xf32>
      %44 = arith.mulf %42, %43 : vector<4x1xf32>
      %c0_41 = arith.constant 0 : index
      %c0_42 = arith.constant 0 : index
      %45 = vector.load %arg8[%c0_41, %c0_42] : memref<4x1xf32, #tpu.memory_space<vmem>>, vector<4x1xf32>
      tpu.vector_store %arg8[%c0_41, %c0_42], %44 {strides = array<i32>} : memref<4x1xf32, #tpu.memory_space<vmem>>, vector<4x1xf32>,
    } else {
    }
    %c0_3 = arith.constant 0 : index
    %c0_4 = arith.constant 0 : index
    %5 = vector.load %arg8[%c0_3, %c0_4] : memref<4x1xf32, #tpu.memory_space<vmem>>, vector<4x1xf32>
    %6 = vector.broadcast %5 : vector<4x1xf32> to vector<4x256xf32>
    %7 = arith.subf %1, %6 : vector<4x256xf32>
    %c0_5 = arith.constant 0 : index
    %c0_6 = arith.constant 0 : index
    %8 = vector.load %arg6[%c0_5, %c0_6] : memref<4x1xf32, #tpu.memory_space<vmem>>, vector<4x1xf32>
    %cst = arith.constant dense<0.000000e+00> : vector<4xf32>
    %9 = vector.multi_reduction <add>, %7, %cst [1] : vector<4x256xf32> to vector<4xf32>
    %10 = vector.shape_cast %9 : vector<4xf32> to vector<4x1xf32>
    %11 = arith.addf %8, %10 : vector<4x1xf32>
    %c0_7 = arith.constant 0 : index
    %c0_8 = arith.constant 0 : index
    %12 = vector.load %arg6[%c0_7, %c0_8] : memref<4x1xf32, #tpu.memory_space<vmem>>, vector<4x1xf32>
    tpu.vector_store %arg6[%c0_7, %c0_8], %11 {strides = array<i32>} : memref<4x1xf32, #tpu.memory_space<vmem>>, vector<4x1xf32>,
    %c0_9 = arith.constant 0 : index
    %c0_10 = arith.constant 0 : index
    %13 = vector.load %arg7[%c0_9, %c0_10] : memref<4x4xf32, #tpu.memory_space<vmem>>, vector<4x4xf32>
    %cst_11 = arith.constant dense<0.000000e+00> : vector<4x4xf32>
    %14 = tpu.matmul %7, %7, %cst_11 {dimension_numbers = #tpu.dot_dimension_numbers<[1], [1], [0], [0], [0, 0, 1, 0], [], []>} : vector<4x256xf32>, vector<4x256xf32>, vector<4x4xf32> -> vector<4x4xf32>
    %15 = arith.addf %13, %14 : vector<4x4xf32>
    %c0_12 = arith.constant 0 : index
    %c0_13 = arith.constant 0 : index
    %16 = vector.load %arg7[%c0_12, %c0_13] : memref<4x4xf32, #tpu.memory_space<vmem>>, vector<4x4xf32>
    tpu.vector_store %arg7[%c0_12, %c0_13], %15 {strides = array<i32>} : memref<4x4xf32, #tpu.memory_space<vmem>>, vector<4x4xf32>,
    %c0_14 = arith.constant 0 : index
    %c0_15 = arith.constant 0 : index
    %c0_16 = arith.constant 0 : index
    %17 = vector.load %arg3[%c0_14, %c0_15, %c0_16] : memref<1x4x256xf32, #tpu.memory_space<vmem>>, vector<1x4x256xf32>
    %18 = vector.shape_cast %17 : vector<1x4x256xf32> to vector<4x256xf32>
    %c0_i32_17 = arith.constant 0 : i32
    %19 = arith.cmpi eq, %arg1, %c0_i32_17 : i32
    %20 = arith.extui %19 : i1 to i32
    %c0_i32_18 = arith.constant 0 : i32
    %21 = arith.cmpi ne, %20, %c0_i32_18 : i32
    scf.if %21 {
      %cst_33 = arith.constant 0.000000e+00 : f32
      %37 = vector.broadcast %cst_33 : f32 to vector<4x1xf32>
      %c0_34 = arith.constant 0 : index
      %c0_35 = arith.constant 0 : index
      %38 = vector.load %arg9[%c0_34, %c0_35] : memref<4x1xf32, #tpu.memory_space<vmem>>, vector<4x1xf32>
      tpu.vector_store %arg9[%c0_34, %c0_35], %37 {strides = array<i32>} : memref<4x1xf32, #tpu.memory_space<vmem>>, vector<4x1xf32>,
      %cst_36 = arith.constant 0.000000e+00 : f32
      %39 = vector.broadcast %cst_36 : f32 to vector<4x4xf32>
      %c0_37 = arith.constant 0 : index
      %c0_38 = arith.constant 0 : index
      %40 = vector.load %arg10[%c0_37, %c0_38] : memref<4x4xf32, #tpu.memory_space<vmem>>, vector<4x4xf32>
      tpu.vector_store %arg10[%c0_37, %c0_38], %39 {strides = array<i32>} : memref<4x4xf32, #tpu.memory_space<vmem>>, vector<4x4xf32>,
      %cst_39 = arith.constant dense<0.000000e+00> : vector<4xf32>
      %41 = vector.multi_reduction <add>, %18, %cst_39 [1] : vector<4x256xf32> to vector<4xf32>
      %42 = vector.shape_cast %41 : vector<4xf32> to vector<4x1xf32>
      %cst_40 = arith.constant 3.906250e-03 : f32
      %43 = vector.broadcast %cst_40 : f32 to vector<4x1xf32>
      %44 = arith.mulf %42, %43 : vector<4x1xf32>
      %c0_41 = arith.constant 0 : index
      %c0_42 = arith.constant 0 : index
      %45 = vector.load %arg11[%c0_41, %c0_42] : memref<4x1xf32, #tpu.memory_space<vmem>>, vector<4x1xf32>
      tpu.vector_store %arg11[%c0_41, %c0_42], %44 {strides = array<i32>} : memref<4x1xf32, #tpu.memory_space<vmem>>, vector<4x1xf32>,
    } else {
    }
    %c0_19 = arith.constant 0 : index
    %c0_20 = arith.constant 0 : index
    %22 = vector.load %arg11[%c0_19, %c0_20] : memref<4x1xf32, #tpu.memory_space<vmem>>, vector<4x1xf32>
    %23 = vector.broadcast %22 : vector<4x1xf32> to vector<4x256xf32>
    %24 = arith.subf %18, %23 : vector<4x256xf32>
    %c0_21 = arith.constant 0 : index
    %c0_22 = arith.constant 0 : index
    %25 = vector.load %arg9[%c0_21, %c0_22] : memref<4x1xf32, #tpu.memory_space<vmem>>, vector<4x1xf32>
    %cst_23 = arith.constant dense<0.000000e+00> : vector<4xf32>
    %26 = vector.multi_reduction <add>, %24, %cst_23 [1] : vector<4x256xf32> to vector<4xf32>
    %27 = vector.shape_cast %26 : vector<4xf32> to vector<4x1xf32>
    %28 = arith.addf %25, %27 : vector<4x1xf32>
    %c0_24 = arith.constant 0 : index
    %c0_25 = arith.constant 0 : index
    %29 = vector.load %arg9[%c0_24, %c0_25] : memref<4x1xf32, #tpu.memory_space<vmem>>, vector<4x1xf32>
    tpu.vector_store %arg9[%c0_24, %c0_25], %28 {strides = array<i32>} : memref<4x1xf32, #tpu.memory_space<vmem>>, vector<4x1xf32>,
    %c0_26 = arith.constant 0 : index
    %c0_27 = arith.constant 0 : index
    %30 = vector.load %arg10[%c0_26, %c0_27] : memref<4x4xf32, #tpu.memory_space<vmem>>, vector<4x4xf32>
    %cst_28 = arith.constant dense<0.000000e+00> : vector<4x4xf32>
    %31 = tpu.matmul %24, %24, %cst_28 {dimension_numbers = #tpu.dot_dimension_numbers<[1], [1], [0], [0], [0, 0, 1, 0], [], []>} : vector<4x256xf32>, vector<4x256xf32>, vector<4x4xf32> -> vector<4x4xf32>
    %32 = arith.addf %30, %31 : vector<4x4xf32>
    %c0_29 = arith.constant 0 : index
    %c0_30 = arith.constant 0 : index
    %33 = vector.load %arg10[%c0_29, %c0_30] : memref<4x4xf32, #tpu.memory_space<vmem>>, vector<4x4xf32>
    tpu.vector_store %arg10[%c0_29, %c0_30], %32 {strides = array<i32>} : memref<4x4xf32, #tpu.memory_space<vmem>>, vector<4x4xf32>,
    %c0_i32_31 = arith.constant 0 : i32
    %34 = arith.cmpi eq, %arg1, %c0_i32_31 : i32
    %35 = arith.extui %34 : i1 to i32
    %c0_i32_32 = arith.constant 0 : i32
    %36 = arith.cmpi ne, %35, %c0_i32_32 : i32
    scf.if %36 {
      %c0_33 = arith.constant 0 : index
      %c0_34 = arith.constant 0 : index
      %37 = vector.load %arg6[%c0_33, %c0_34] : memref<4x1xf32, #tpu.memory_space<vmem>>, vector<4x1xf32>
      %cst_35 = arith.constant dense<0.000000e+00> : vector<4x4xf32>
      %38 = tpu.matmul %37, %37, %cst_35 {dimension_numbers = #tpu.dot_dimension_numbers<[1], [1], [0], [0], [0, 0, 1, 0], [], []>} : vector<4x1xf32>, vector<4x1xf32>, vector<4x4xf32> -> vector<4x4xf32>
      %c0_36 = arith.constant 0 : index
      %c0_37 = arith.constant 0 : index
      %39 = vector.load %arg7[%c0_36, %c0_37] : memref<4x4xf32, #tpu.memory_space<vmem>>, vector<4x4xf32>
      %cst_38 = arith.constant 3.906250e-03 : f32
      %40 = vector.broadcast %cst_38 : f32 to vector<4x4xf32>
      %41 = arith.mulf %38, %40 : vector<4x4xf32>
      %42 = arith.subf %39, %41 : vector<4x4xf32>
      %cst_39 = arith.constant 3.906250e-03 : f32
      %43 = vector.broadcast %cst_39 : f32 to vector<4x4xf32>
      %44 = arith.mulf %42, %43 : vector<4x4xf32>
      %c0_40 = arith.constant 0 : index
      %c0_41 = arith.constant 0 : index
      %c0_42 = arith.constant 0 : index
      %c0_43 = arith.constant 0 : index
      %45 = vector.load %arg4[%c0_40, %c0_41, %c0_42, %c0_43] : memref<2x1x4x4xf32, #tpu.memory_space<vmem>>, vector<1x1x4x4xf32>
      %46 = vector.shape_cast %45 : vector<1x1x4x4xf32> to vector<4x4xf32>
      %47 = vector.shape_cast %44 : vector<4x4xf32> to vector<1x1x4x4xf32>
      tpu.vector_store %arg4[%c0_40, %c0_41, %c0_42, %c0_43], %47 {strides = array<i32>} : memref<2x1x4x4xf32, #tpu.memory_space<vmem>>, vector<1x1x4x4xf32>,
      %c0_44 = arith.constant 0 : index
      %c0_45 = arith.constant 0 : index
      %48 = vector.load %arg9[%c0_44, %c0_45] : memref<4x1xf32, #tpu.memory_space<vmem>>, vector<4x1xf32>
      %cst_46 = arith.constant dense<0.000000e+00> : vector<4x4xf32>
      %49 = tpu.matmul %48, %48, %cst_46 {dimension_numbers = #tpu.dot_dimension_numbers<[1], [1], [0], [0], [0, 0, 1, 0], [], []>} : vector<4x1xf32>, vector<4x1xf32>, vector<4x4xf32> -> vector<4x4xf32>
      %c0_47 = arith.constant 0 : index
      %c0_48 = arith.constant 0 : index
      %50 = vector.load %arg10[%c0_47, %c0_48] : memref<4x4xf32, #tpu.memory_space<vmem>>, vector<4x4xf32>
      %cst_49 = arith.constant 3.906250e-03 : f32
      %51 = vector.broadcast %cst_49 : f32 to vector<4x4xf32>
      %52 = arith.mulf %49, %51 : vector<4x4xf32>
      %53 = arith.subf %50, %52 : vector<4x4xf32>
      %cst_50 = arith.constant 3.906250e-03 : f32
      %54 = vector.broadcast %cst_50 : f32 to vector<4x4xf32>
      %55 = arith.mulf %53, %54 : vector<4x4xf32>
      %c1 = arith.constant 1 : index
      %c0_51 = arith.constant 0 : index
      %c0_52 = arith.constant 0 : index
      %c0_53 = arith.constant 0 : index
      %56 = vector.load %arg4[%c1, %c0_51, %c0_52, %c0_53] : memref<2x1x4x4xf32, #tpu.memory_space<vmem>>, vector<1x1x4x4xf32>
      %57 = vector.shape_cast %56 : vector<1x1x4x4xf32> to vector<4x4xf32>
      %58 = vector.shape_cast %55 : vector<4x4xf32> to vector<1x1x4x4xf32>
      tpu.vector_store %arg4[%c1, %c0_51, %c0_52, %c0_53], %58 {strides = array<i32>} : memref<2x1x4x4xf32, #tpu.memory_space<vmem>>, vector<1x1x4x4xf32>,
      %c0_54 = arith.constant 0 : index
      %c0_55 = arith.constant 0 : index
      %59 = vector.load %arg11[%c0_54, %c0_55] : memref<4x1xf32, #tpu.memory_space<vmem>>, vector<4x1xf32>
      %c0_56 = arith.constant 0 : index
      %c0_57 = arith.constant 0 : index
      %60 = vector.load %arg9[%c0_56, %c0_57] : memref<4x1xf32, #tpu.memory_space<vmem>>, vector<4x1xf32>
      %cst_58 = arith.constant 3.906250e-03 : f32
      %61 = vector.broadcast %cst_58 : f32 to vector<4x1xf32>
      %62 = arith.mulf %60, %61 : vector<4x1xf32>
      %63 = arith.addf %59, %62 : vector<4x1xf32>
      %c0_59 = arith.constant 0 : index
      %c0_60 = arith.constant 0 : index
      %c0_61 = arith.constant 0 : index
      %64 = vector.load %arg5[%c0_59, %c0_60, %c0_61] : memref<1x4x1xf32, #tpu.memory_space<vmem>>, vector<1x4x1xf32>
      %65 = vector.shape_cast %64 : vector<1x4x1xf32> to vector<4x1xf32>
      %66 = vector.shape_cast %63 : vector<4x1xf32> to vector<1x4x1xf32>
      tpu.vector_store %arg5[%c0_59, %c0_60, %c0_61], %66 {strides = array<i32>} : memref<1x4x1xf32, #tpu.memory_space<vmem>>, vector<1x4x1xf32>,
    } else {
    }
    return
  }
  func.func @transform_0(%arg0: i32, %arg1: i32) -> (i32, i32, i32) {
    %c0_i32 = arith.constant 0 : i32
    %c0_i32_0 = arith.constant 0 : i32
    return %arg0, %c0_i32, %arg1 : i32, i32, i32
  }
  func.func @transform_1(%arg0: i32, %arg1: i32) -> (i32, i32, i32) {
    %c0_i32 = arith.constant 0 : i32
    %c0_i32_0 = arith.constant 0 : i32
    return %arg0, %c0_i32, %arg1 : i32, i32, i32
  }
  func.func @transform_2(%arg0: i32, %arg1: i32) -> (i32, i32, i32, i32) {
    %c0_i32 = arith.constant 0 : i32
    %c0_i32_0 = arith.constant 0 : i32
    %c0_i32_1 = arith.constant 0 : i32
    %c0_i32_2 = arith.constant 0 : i32
    return %c0_i32, %arg0, %c0_i32_0, %c0_i32_1 : i32, i32, i32, i32
  }
  func.func @transform_3(%arg0: i32, %arg1: i32) -> (i32, i32, i32) {
    %c0_i32 = arith.constant 0 : i32
    %c0_i32_0 = arith.constant 0 : i32
    %c0_i32_1 = arith.constant 0 : i32
    return %arg0, %c0_i32, %c0_i32_0 : i32, i32, i32
  }
}

</mosaic_0001>

<llo_original>
// kernel: tpu_custom_call.1
$region0: #{tpu_custom_call.1}
  #allocation0 [shape = 'u32[]', space=smem, size = 0x4, offset = 0x4, fixed_abs, tag = 'smem constant byte address 0x4 - core index']
  #allocation1 [shape = 'u32[72,128]{1,0:T(1,128)}', space=vmem, size = 0x9000, scoped, tag = 'internal scratch']
  #allocation2 [shape = 'f32[4,1]{1,0:T(4,128)}', space=vmem, size = 0x800, scoped, tag = 'scratch operand']
  #allocation3 [shape = 'f32[4,4]{1,0:T(4,128)}', space=vmem, size = 0x800, scoped, tag = 'scratch operand']
  #allocation4 [shape = 'f32[4,1]{1,0:T(4,128)}', space=vmem, size = 0x800, scoped, tag = 'scratch operand']
  #allocation5 [shape = 'f32[4,1]{1,0:T(4,128)}', space=vmem, size = 0x800, scoped, tag = 'scratch operand']
  #allocation6 [shape = 'f32[4,4]{1,0:T(4,128)}', space=vmem, size = 0x800, scoped, tag = 'scratch operand']
  #allocation7 [shape = 'f32[4,1]{1,0:T(4,128)}', space=vmem, size = 0x800, scoped, tag = 'scratch operand']
  %s0 = inlined_call_operand.hbm [shape: f32[2,4,256], index: 0, kind: input, shape index: {}]
  %s1 = inlined_call_operand.hbm [shape: f32[2,4,256], index: 1, kind: input, shape index: {}]
  %s2 = inlined_call_operand.hbm [shape: f32[2,2,4,4], index: 2, kind: output, shape index: {0}]
  %s3 = inlined_call_operand.vmem [shape: f32[2,4,1], index: 3, kind: output, shape index: {1}]
  %4 = xla_tuple %s2, %s3
  %s5 = sld [smem:[#allocation0]]
  $region69: #{tpu_custom_call.1} parent=0
    _
  %s7 = ssub.s32 1, %s5
  %s8 = scalar_select 0, %s7, %s5
  $region1: #{tpu_custom_call.1} parent=0
    #allocation8 [shape = 'u8[8192]{0}', space=vmem, size = 0x2000, scoped, tag = 'input window, operand 0']
    #allocation9 [shape = 's32[2]{0}', space=sflag, size = 0x8, scoped, tag = 'scoped memory for tpu_custom_call.1']
    #allocation10 [shape = 's32[2]{0}', space=sflag, size = 0x8, scoped, tag = 'scoped memory for tpu_custom_call.1']
    #allocation11 [shape = 'u8[8192]{0}', space=vmem, size = 0x2000, scoped, tag = 'input window, operand 1']
    #allocation12 [shape = 's32[2]{0}', space=sflag, size = 0x8, scoped, tag = 'scoped memory for tpu_custom_call.1']
    #allocation13 [shape = 'u8[8192]{0}', space=vmem, size = 0x2000, scoped, tag = 'output window, operand 0']
    %9 = vsyncpa [#allocation9], 0
    %s10 = scalar_lea.sflag [#allocation9], 1
    %11 = vsyncpa %s10, 0
    %12 = vsyncpa [#allocation12], 0
    %s13 = scalar_lea.sflag [#allocation12], 1
    %14 = vsyncpa %s13, 0
    %15 = vsyncpa [#allocation10], 0
    %s16 = scalar_lea.sflag [#allocation10], 1
    %17 = vsyncpa %s16, 0
    loop: start=0, step=1, limit=4
    $region2: #{tpu_custom_call.1} parent=1 // loop_pre_header
      _
    $region3: #{tpu_custom_call.1} parent=1 // loop_header
      %s19 = sphi 0, %s23
      %p20 = scmp.ge.s32.totalorder %s19, 4
      %s26 = sphi 0, %s38
      %s27 = sphi 0, %s34
      %s28 = sphi 0, %s26
      %s29 = sphi 0, %s27
      %s30 = sphi 0, %s28
      %s31 = sphi 0, %s29
      %s43 = sphi 0, %s45
      %s46 = sphi 0, %s43
      %s47 = sphi 0, %s46
      %s63 = sphi 0, %s47
      %s71 = sphi 0, %s73
      %s74 = sphi 0, %s71
      %s75 = sphi 0, %s74
      %s91 = sphi 0, %s75
      %s97 = sphi 0, %s99
      %s100 = sphi 0, %s97
      %s101 = sphi 0, %s100
      %s117 = sphi 0, %s101
      %s123 = sphi 0, %s125
      %s126 = sphi 0, %s123
      %s127 = sphi 0, %s126
      %s143 = sphi 0, %s127
    $region4: #{tpu_custom_call.1} parent=1 // loop_header_branch
      %22 = sbr.rel (%p20) target = $region8
    $region5: #{tpu_custom_call.1} parent=1 // loop_body
      %s24 = ssub.s32 %s19, 1
      %s25 = ssub.s32 %s19, 2
      %s32 = sadd.s32 1, %s27
      %p33 = scmp.ge.s32.totalorder %s32, 1
      %s34 = scalar_select %p33, 0, %s32
      %s35 = sadd.s32 1, %s26
      %s36 = scalar_select %p33, %s35, %s26
      %p37 = scmp.ge.s32.totalorder %s36, 2
      %s38 = scalar_select %p37, 0, %s36
      %s39 = ssub.s32 %s26, %s38
      %s40 = ssub.s32 %s27, %s34
      %s41 = sor.u32 %s39, %s40
      %p42 = scmp.eq.s32.totalorder %s41, 0
      %s44 = sadd.s32 %s43, 1
      %s45 = scalar_select %p42, %s43, %s44
      %p48 = pneg %p42
      %p49 = scmp.eq.s32.totalorder %s19, 1
      %p50 = por %p48, %p49
      %p51 = scmp.ne.s32.totalorder %s43, %s46
      %p52 = scmp.eq.s32.totalorder %s19, 0
      %p53 = por %p51, %p52
      %p54 = scmp.ne.s32.totalorder %s43, %s46
      %p55 = scmp.eq.s32.totalorder %s24, 1
      %p56 = por %p54, %p55
      %p57 = scmp.ne.s32.totalorder %s46, %s47
      %p58 = scmp.eq.s32.totalorder %s24, 0
      %p59 = por %p57, %p58
      %p60 = scmp.ne.s32.totalorder %s46, %s47
      %p61 = scmp.eq.s32.totalorder %s25, 1
      %p62 = por %p60, %p61
      %p64 = scmp.ne.s32.totalorder %s47, %s63
      %p65 = scmp.eq.s32.totalorder %s25, 0
      %p66 = por %p64, %p65
      %s67 = ssub.s32 %s26, %s38
      %s68 = ssub.s32 %s27, %s34
      %s69 = sor.u32 %s67, %s68
      %p70 = scmp.eq.s32.totalorder %s69, 0
      %s72 = sadd.s32 %s71, 1
      %s73 = scalar_select %p70, %s71, %s72
      %p76 = pneg %p70
      %p77 = scmp.eq.s32.totalorder %s19, 1
      %p78 = por %p76, %p77
      %p79 = scmp.ne.s32.totalorder %s71, %s74
      %p80 = scmp.eq.s32.totalorder %s19, 0
      %p81 = por %p79, %p80
      %p82 = scmp.ne.s32.totalorder %s71, %s74
      %p83 = scmp.eq.s32.totalorder %s24, 1
      %p84 = por %p82, %p83
      %p85 = scmp.ne.s32.totalorder %s74, %s75
      %p86 = scmp.eq.s32.totalorder %s24, 0
      %p87 = por %p85, %p86
      %p88 = scmp.ne.s32.totalorder %s74, %s75
      %p89 = scmp.eq.s32.totalorder %s25, 1
      %p90 = por %p88, %p89
      %p92 = scmp.ne.s32.totalorder %s75, %s91
      %p93 = scmp.eq.s32.totalorder %s25, 0
      %p94 = por %p92, %p93
      %s95 = ssub.s32 %s26, %s38
      %p96 = scmp.eq.s32.totalorder %s95, 0
      %s98 = sadd.s32 %s97, 1
      %s99 = scalar_select %p96, %s97, %s98
      %p102 = pneg %p96
      %p103 = scmp.eq.s32.totalorder %s19, 1
      %p104 = por %p102, %p103
      %p105 = scmp.ne.s32.totalorder %s97, %s100
      %p106 = scmp.eq.s32.totalorder %s19, 0
      %p107 = por %p105, %p106
      %p108 = scmp.ne.s32.totalorder %s97, %s100
      %p109 = scmp.eq.s32.totalorder %s24, 1
      %p110 = por %p108, %p109
      %p111 = scmp.ne.s32.totalorder %s100, %s101
      %p112 = scmp.eq.s32.totalorder %s24, 0
      %p113 = por %p111, %p112
      %p114 = scmp.ne.s32.totalorder %s100, %s101
      %p115 = scmp.eq.s32.totalorder %s25, 1
      %p116 = por %p114, %p115
      %p118 = scmp.ne.s32.totalorder %s101, %s117
      %p119 = scmp.eq.s32.totalorder %s25, 0
      %p120 = por %p118, %p119
      %s121 = ssub.s32 %s26, %s38
      %p122 = scmp.eq.s32.totalorder %s121, 0
      %s124 = sadd.s32 %s123, 1
      %s125 = scalar_select %p122, %s123, %s124
      %p128 = pneg %p122
      %p129 = scmp.eq.s32.totalorder %s19, 1
      %p130 = por %p128, %p129
      %p131 = scmp.ne.s32.totalorder %s123, %s126
      %p132 = scmp.eq.s32.totalorder %s19, 0
      %p133 = por %p131, %p132
      %p134 = scmp.ne.s32.totalorder %s123, %s126
      %p135 = scmp.eq.s32.totalorder %s24, 1
      %p136 = por %p134, %p135
      %p137 = scmp.ne.s32.totalorder %s126, %s127
      %p138 = scmp.eq.s32.totalorder %s24, 0
      %p139 = por %p137, %p138
      %p140 = scmp.ne.s32.totalorder %s126, %s127
      %p141 = scmp.eq.s32.totalorder %s25, 1
      %p142 = por %p140, %p141
      %p144 = scmp.ne.s32.totalorder %s127, %s143
      %p145 = scmp.eq.s32.totalorder %s25, 0
      %p146 = por %p144, %p145
      %p147 = scmp.le.s32.totalorder 1, %s19
      %p148 = scmp.lt.s32.totalorder %s19, 3
      %p149 = pnand %p147, %p148
      %p150 = pneg %p149
      // Predicated region
      $region9: #{tpu_custom_call.1} parent=5 // pred_check
        _
      $region10: #{tpu_custom_call.1} parent=5 // pred_check_branch
        %152 = sbr.rel (%p149) target = $region12
      $region11: #{tpu_custom_call.1} parent=5 // pred_region
        %s153 = ssub.s32 %s19, 1
      $region12: #{tpu_custom_call.1} parent=5 // pred_fallthru
        _
      %p154 = scmp.lt.s32.totalorder %s19, 2
      // Predicated region
      $region13: #{tpu_custom_call.1} parent=5 // pred_check
        %p155 = pneg %p154
      $region14: #{tpu_custom_call.1} parent=5 // pred_check_branch
        %157 = sbr.rel (%p155) target = $region16
      $region15: #{tpu_custom_call.1} parent=5 // pred_region
        // Predicated region
        $region17: #{tpu_custom_call.1} parent=15 // pred_check
          %p158 = pneg %p53
        $region18: #{tpu_custom_call.1} parent=15 // pred_check_branch
          %160 = sbr.rel (%p158) target = $region20
        $region19: #{tpu_custom_call.1} parent=15 // pred_region
          %s161 = sand.u32 %s43, 1
          %s162 = scalar_lea.sflag [#allocation9], %s161
          %s163 = sand.u32 %s43, 1
          %s164 = smul.addr %s163, 8
          %s165 = scalar_lea.vmem [#allocation8], %s164
          %s166 = smul.u32 2, %s27
          %168 = vsyncadd %s162, 0
          %s169 = smul.addr %s26, 2
          %s170 = sadd.s32 %s166, %s169
          %s171 = smul.addr %s170, 4
          %s172 = scalar_lea.hbm %s0, %s171
          %s174 = sshll.u32 %s172, 4
          %s175 = int_to_ptr.hbm [resolvable:$true] %s174
          %s176 = sshll.u32 %s165, 4
          %s177 = int_to_ptr.vmem [resolvable:$true] %s176
          %179 = dma.hbm_to_vmem [thread:$0]  %s175, 128, %s177, %s162
        $region20: #{tpu_custom_call.1} parent=15 // pred_fallthru
          _
        // Predicated region
        $region21: #{tpu_custom_call.1} parent=15 // pred_check
          %p180 = pneg %p81
        $region22: #{tpu_custom_call.1} parent=15 // pred_check_branch
          %182 = sbr.rel (%p180) target = $region24
        $region23: #{tpu_custom_call.1} parent=15 // pred_region
          %s183 = sand.u32 %s71, 1
          %s184 = scalar_lea.sflag [#allocation12], %s183
          %s185 = sand.u32 %s71, 1
          %s186 = smul.addr %s185, 8
          %s187 = scalar_lea.vmem [#allocation11], %s186
          %s188 = smul.u32 2, %s27
          %190 = vsyncadd %s184, 0
          %s191 = smul.addr %s26, 2
          %s192 = sadd.s32 %s188, %s191
          %s193 = smul.addr %s192, 4
          %s194 = scalar_lea.hbm %s1, %s193
          %s196 = sshll.u32 %s194, 4
          %s197 = int_to_ptr.hbm [resolvable:$true] %s196
          %s198 = sshll.u32 %s187, 4
          %s199 = int_to_ptr.vmem [resolvable:$true] %s198
          %201 = dma.hbm_to_vmem [thread:$0]  %s197, 128, %s199, %s184
        $region24: #{tpu_custom_call.1} parent=15 // pred_fallthru
          _
      $region16: #{tpu_custom_call.1} parent=5 // pred_fallthru
        _
      %p202 = scmp.le.s32.totalorder 1, %s19
      %p203 = scmp.lt.s32.totalorder %s19, 3
      %p204 = pnand %p202, %p203
      %p205 = pneg %p204
      // Predicated region
      $region25: #{tpu_custom_call.1} parent=5 // pred_check
        _
      $region26: #{tpu_custom_call.1} parent=5 // pred_check_branch
        %207 = sbr.rel (%p204) target = $region28
      $region27: #{tpu_custom_call.1} parent=5 // pred_region
        %s208 = ssub.s32 %s19, 1
        %s209 = sand.u32 %s46, 1
        %s210 = scalar_lea.sflag [#allocation9], %s209
        %s211 = sand.u32 %s46, 1
        %s212 = smul.addr %s211, 8
        %s213 = scalar_lea.vmem [#allocation8], %s212
        // Predicated region
        $region29: #{tpu_custom_call.1} parent=27 // pred_check
          %p214 = pneg %p59
        $region30: #{tpu_custom_call.1} parent=27 // pred_check_branch
          %216 = sbr.rel (%p214) target = $region32
        $region31: #{tpu_custom_call.1} parent=27 // pred_region
          %218 = dma.done %s210, 128
        $region32: #{tpu_custom_call.1} parent=27 // pred_fallthru
          _
        %s219 = sand.u32 %s74, 1
        %s220 = scalar_lea.sflag [#allocation12], %s219
        %s221 = sand.u32 %s74, 1
        %s222 = smul.addr %s221, 8
        %s223 = scalar_lea.vmem [#allocation11], %s222
        // Predicated region
        $region33: #{tpu_custom_call.1} parent=27 // pred_check
          %p224 = pneg %p87
        $region34: #{tpu_custom_call.1} parent=27 // pred_check_branch
          %226 = sbr.rel (%p224) target = $region36
        $region35: #{tpu_custom_call.1} parent=27 // pred_region
          %228 = dma.done %s220, 128
        $region36: #{tpu_custom_call.1} parent=27 // pred_fallthru
          _
        %s229 = sand.u32 %s46, 1
        %s230 = scalar_lea.sflag [#allocation9], %s229
        %s231 = sand.u32 %s46, 1
        %s232 = smul.addr %s231, 8
        %s233 = scalar_lea.vmem [#allocation8], %s232
        %p234 = pneg %p59
        %p235 = pneg %p56
        %s236 = sand.u32 %s74, 1
        %s237 = scalar_lea.sflag [#allocation12], %s236
        %s238 = sand.u32 %s74, 1
        %s239 = smul.addr %s238, 8
        %s240 = scalar_lea.vmem [#allocation11], %s239
        %p241 = pneg %p87
        %p242 = pneg %p84
        %p243 = pneg %p113
        %p244 = pneg %p110
        %s245 = sand.u32 %s100, 1
        %s246 = scalar_lea.sflag [#allocation10], %s245
        %s247 = sand.u32 %s100, 1
        %s248 = smul.addr %s247, 8
        %s249 = scalar_lea.vmem [#allocation13], %s248
        %p250 = pneg %p139
        %p251 = pneg %p136
        %p252 = scmp.lt.s32.totalorder %s28, 1
        %s253 = scalar_select %p252, %s28, 1
        %s254 = smul.addr %s253, 4
        %s255 = scalar_lea.vmem %s3, %s254
        %s256 = smul.u32 2, %s29
        %s257 = smul.u32 2, %s29
        %p258 = scmp.lt.s32.totalorder %s28, 1
        %s259 = scalar_select %p258, %s28, 1
        %s260 = smul.addr %s259, 4
        %s261 = scalar_lea.vmem %s3, %s260
        %v262 = vld [vmem:[%s213] sm:$0xff]
        %p263 = scmp.eq.s32.totalorder %s29, 0
        // Predicated region
        $region37: #{tpu_custom_call.1} parent=27 // pred_check
          %p264 = pneg %p263
        $region38: #{tpu_custom_call.1} parent=27 // pred_check_branch
          %266 = sbr.rel (%p264) target = $region40
        $region39: #{tpu_custom_call.1} parent=27 // pred_region
          %vm267 = vcmask 3072
          %268 = vst.msk [vmem:[#allocation2] sm:$0xf] %vm267, 0.0
          %vm269 = vcmask 27648
          %270 = vst.msk [vmem:[#allocation3] sm:$0xf] %vm269, 0.0
          %272 = vst [vmem:[#allocation1] ss:$2 sm:$0xff] %v262
          %v273 = vld.sshfl [vmem:[#allocation1] sm:$0xff pattern:$0x75316420]
          %v274 = vld.sshfl [vmem:[#allocation1 + $0x8] sm:$0xff pattern:$0x75316420]
          %vm277 = vcmask 1043456
          %v278 = vsel %vm277, %v273, 0.0
          %v279 = vsel %vm277, %v274, 0.0
          %v280 = vadd.f32 %v278, %v279
          %281 = vadd.xlane.f32.xlu0 %v280
          %v282 = vpop.xlane.xlu0 %281
          %v283 = vmul.f32 %v282, 0.00390625
          %284 = vst.msk [vmem:[#allocation4] sm:$0xf] %vm267, %v283
        $region40: #{tpu_custom_call.1} parent=27 // pred_fallthru
          _
        %v285 = vld [vmem:[#allocation4] sm:$0xf]
        %287 = vset.pattern.permute.xlu0 0
        %288 = vperm.xlu0 %287, %v285
        %v289 = vpop.permute.xlu0 %288
        %v291 = vunpack.c.l.s4 839922192
        %v292 = vunpack.c.0.s8 %v291
        %v293 = vperm.slane %v289, %v292
        %v295 = vsub.f32 %v262, %v293
        %v296 = vld [vmem:[#allocation2] sm:$0xf]
        %298 = vst [vmem:[#allocation1] ss:$2 sm:$0xff] %v295
        %v299 = vld.sshfl [vmem:[#allocation1] sm:$0xff pattern:$0x75316420]
        %v300 = vld.sshfl [vmem:[#allocation1 + $0x8] sm:$0xff pattern:$0x75316420]
        %vm303 = vcmask 1043456
        %v304 = vsel %vm303, %v299, 0.0
        %v305 = vsel %vm303, %v300, 0.0
        %v306 = vadd.f32 %v304, %v305
        %307 = vadd.xlane.f32.xlu0 %v306
        %v308 = vpop.xlane.xlu0 %307
        %v309 = vadd.f32 %v296, %v308
        %vm310 = vcmask 3072
        %311 = vst.msk [vmem:[#allocation2] sm:$0xf] %vm310, %v309
        %v312 = vld [vmem:[#allocation3] sm:$0xf]
        %313 = vst [vmem:[#allocation1] ss:$2 sm:$0xff] %v295
        %v314 = vld.sshfl [vmem:[#allocation1] sm:$0xff pattern:$0x75316420]
        %v315 = vld.sshfl [vmem:[#allocation1 + $0x8] sm:$0xff pattern:$0x75316420]
        %318 = vst [vmem:[#allocation1] ss:$2 sm:$0xff] %v295
        %v319 = vld.sshfl [vmem:[#allocation1] sm:$0xff pattern:$0x75316420]
        %v320 = vld.sshfl [vmem:[#allocation1 + $0x8] sm:$0xff pattern:$0x75316420]
        %323 = vmatpush.xpose.msra.mxu0 0.0
        %324 = vmatpush.xpose.msra.mxu0 0.0
        %325 = vmatpush.xpose.msra.mxu0 0.0
        %326 = vmatpush.xpose.msra.mxu0 0.0
        %327 = vmatpush.xpose.msra.mxu0 0.0
        %328 = vmatpush.xpose.msra.mxu0 0.0
        %329 = vmatpush.xpose.msra.mxu0 0.0
        %330 = vmatpush.xpose.msra.mxu0 0.0
        %331 = vmatpush.xpose.msra.mxu0 0.0
        %332 = vmatpush.xpose.msra.mxu0 0.0
        %333 = vmatpush.xpose.msra.mxu0 0.0
        %334 = vmatpush.xpose.msra.mxu0 0.0
        %335 = vmatpush.xpose.msra.mxu0 0.0
        %336 = vmatpush.xpose.msra.mxu0 0.0
        %337 = vmatpush.xpose.msra.mxu0 0.0
        %338 = vmatpush.xpose.msra.mxu0 %v319
        %339 = vmatmul.f32.gmra.mxu0 %v314
        %v340 = vpop.f32.mrf.mxu0
        %v341 = vadd.f32 0.0, %v340
        %342 = vdwg.mxu0
        %343 = vmatpush.xpose.msra.mxu0 0.0
        %344 = vmatpush.xpose.msra.mxu0 0.0
        %345 = vmatpush.xpose.msra.mxu0 0.0
        %346 = vmatpush.xpose.msra.mxu0 0.0
        %347 = vmatpush.xpose.msra.mxu0 0.0
        %348 = vmatpush.xpose.msra.mxu0 0.0
        %349 = vmatpush.xpose.msra.mxu0 0.0
        %350 = vmatpush.xpose.msra.mxu0 0.0
        %351 = vmatpush.xpose.msra.mxu0 0.0
        %352 = vmatpush.xpose.msra.mxu0 0.0
        %353 = vmatpush.xpose.msra.mxu0 0.0
        %354 = vmatpush.xpose.msra.mxu0 0.0
        %355 = vmatpush.xpose.msra.mxu0 0.0
        %356 = vmatpush.xpose.msra.mxu0 0.0
        %357 = vmatpush.xpose.msra.mxu0 0.0
        %358 = vmatpush.xpose.msra.mxu0 %v320
        %359 = vmatmul.f32.gmra.mxu0 %v315
        %v360 = vpop.f32.mrf.mxu0
        %v361 = vadd.f32 %v341, %v360
        %362 = vdwg.mxu0
        %v363 = vadd.f32 %v312, %v361
        %vm364 = vcmask 27648
        %365 = vst.msk [vmem:[#allocation3] sm:$0xf] %vm364, %v363
        %v366 = vld [vmem:[%s223] sm:$0xff]
        // Predicated region
        $region41: #{tpu_custom_call.1} parent=27 // pred_check
          %p367 = pneg %p263
        $region42: #{tpu_custom_call.1} parent=27 // pred_check_branch
          %369 = sbr.rel (%p367) target = $region44
        $region43: #{tpu_custom_call.1} parent=27 // pred_region
          %370 = vst.msk [vmem:[#allocation5] sm:$0xf] %vm310, 0.0
          %371 = vst.msk [vmem:[#allocation6] sm:$0xf] %vm364, 0.0
          %373 = vst [vmem:[#allocation1] ss:$2 sm:$0xff] %v366
          %v374 = vld.sshfl [vmem:[#allocation1] sm:$0xff pattern:$0x75316420]
          %v375 = vld.sshfl [vmem:[#allocation1 + $0x8] sm:$0xff pattern:$0x75316420]
          %v378 = vsel %vm303, %v374, 0.0
          %v379 = vsel %vm303, %v375, 0.0
          %v380 = vadd.f32 %v378, %v379
          %381 = vadd.xlane.f32.xlu0 %v380
          %v382 = vpop.xlane.xlu0 %381
          %v383 = vmul.f32 %v382, 0.00390625
          %384 = vst.msk [vmem:[#allocation7] sm:$0xf] %vm310, %v383
        $region44: #{tpu_custom_call.1} parent=27 // pred_fallthru
          _
        %v385 = vld [vmem:[#allocation7] sm:$0xf]
        %387 = vset.pattern.permute.xlu0 0
        %388 = vperm.xlu0 %387, %v385
        %v389 = vpop.permute.xlu0 %388
        %v391 = vunpack.c.l.s4 839922192
        %v392 = vunpack.c.0.s8 %v391
        %v393 = vperm.slane %v389, %v392
        %v395 = vsub.f32 %v366, %v393
        %v396 = vld [vmem:[#allocation5] sm:$0xf]
        %398 = vst [vmem:[#allocation1] ss:$2 sm:$0xff] %v395
        %v399 = vld.sshfl [vmem:[#allocation1] sm:$0xff pattern:$0x75316420]
        %v400 = vld.sshfl [vmem:[#allocation1 + $0x8] sm:$0xff pattern:$0x75316420]
        %v403 = vsel %vm303, %v399, 0.0
        %v404 = vsel %vm303, %v400, 0.0
        %v405 = vadd.f32 %v403, %v404
        %406 = vadd.xlane.f32.xlu0 %v405
        %v407 = vpop.xlane.xlu0 %406
        %v408 = vadd.f32 %v396, %v407
        %409 = vst.msk [vmem:[#allocation5] sm:$0xf] %vm310, %v408
        %v410 = vld [vmem:[#allocation6] sm:$0xf]
        %411 = vst [vmem:[#allocation1] ss:$2 sm:$0xff] %v395
        %v412 = vld.sshfl [vmem:[#allocation1] sm:$0xff pattern:$0x75316420]
        %v413 = vld.sshfl [vmem:[#allocation1 + $0x8] sm:$0xff pattern:$0x75316420]
        %416 = vst [vmem:[#allocation1] ss:$2 sm:$0xff] %v395
        %v417 = vld.sshfl [vmem:[#allocation1] sm:$0xff pattern:$0x75316420]
        %v418 = vld.sshfl [vmem:[#allocation1 + $0x8] sm:$0xff pattern:$0x75316420]
        %421 = vmatpush.xpose.msra.mxu0 0.0
        %422 = vmatpush.xpose.msra.mxu0 0.0
        %423 = vmatpush.xpose.msra.mxu0 0.0
        %424 = vmatpush.xpose.msra.mxu0 0.0
        %425 = vmatpush.xpose.msra.mxu0 0.0
        %426 = vmatpush.xpose.msra.mxu0 0.0
        %427 = vmatpush.xpose.msra.mxu0 0.0
        %428 = vmatpush.xpose.msra.mxu0 0.0
        %429 = vmatpush.xpose.msra.mxu0 0.0
        %430 = vmatpush.xpose.msra.mxu0 0.0
        %431 = vmatpush.xpose.msra.mxu0 0.0
        %432 = vmatpush.xpose.msra.mxu0 0.0
        %433 = vmatpush.xpose.msra.mxu0 0.0
        %434 = vmatpush.xpose.msra.mxu0 0.0
        %435 = vmatpush.xpose.msra.mxu0 0.0
        %436 = vmatpush.xpose.msra.mxu0 %v417
        %437 = vmatmul.f32.gmra.mxu0 %v412
        %v438 = vpop.f32.mrf.mxu0
        %v439 = vadd.f32 0.0, %v438
        %440 = vdwg.mxu0
        %441 = vmatpush.xpose.msra.mxu0 0.0
        %442 = vmatpush.xpose.msra.mxu0 0.0
        %443 = vmatpush.xpose.msra.mxu0 0.0
        %444 = vmatpush.xpose.msra.mxu0 0.0
        %445 = vmatpush.xpose.msra.mxu0 0.0
        %446 = vmatpush.xpose.msra.mxu0 0.0
        %447 = vmatpush.xpose.msra.mxu0 0.0
        %448 = vmatpush.xpose.msra.mxu0 0.0
        %449 = vmatpush.xpose.msra.mxu0 0.0
        %450 = vmatpush.xpose.msra.mxu0 0.0
        %451 = vmatpush.xpose.msra.mxu0 0.0
        %452 = vmatpush.xpose.msra.mxu0 0.0
        %453 = vmatpush.xpose.msra.mxu0 0.0
        %454 = vmatpush.xpose.msra.mxu0 0.0
        %455 = vmatpush.xpose.msra.mxu0 0.0
        %456 = vmatpush.xpose.msra.mxu0 %v418
        %457 = vmatmul.f32.gmra.mxu0 %v413
        %v458 = vpop.f32.mrf.mxu0
        %v459 = vadd.f32 %v439, %v458
        %460 = vdwg.mxu0
        %v461 = vadd.f32 %v410, %v459
        %462 = vst.msk [vmem:[#allocation6] sm:$0xf] %vm364, %v461
        // Predicated region
        $region45: #{tpu_custom_call.1} parent=27 // pred_check
          %p463 = pneg %p263
        $region46: #{tpu_custom_call.1} parent=27 // pred_check_branch
          %465 = sbr.rel (%p463) target = $region48
        $region47: #{tpu_custom_call.1} parent=27 // pred_region
          %v466 = vld [vmem:[#allocation2] sm:$0xf]
          %vm467 = vcmask 7168
          %v469 = vsel %vm467, %v466, 0
          %471 = vmatpush.xpose.msra.mxu0 0.0
          %472 = vmatpush.xpose.msra.mxu0 0.0
          %473 = vmatpush.xpose.msra.mxu0 0.0
          %474 = vmatpush.xpose.msra.mxu0 0.0
          %475 = vmatpush.xpose.msra.mxu0 0.0
          %476 = vmatpush.xpose.msra.mxu0 0.0
          %477 = vmatpush.xpose.msra.mxu0 0.0
          %478 = vmatpush.xpose.msra.mxu0 0.0
          %479 = vmatpush.xpose.msra.mxu0 0.0
          %480 = vmatpush.xpose.msra.mxu0 0.0
          %481 = vmatpush.xpose.msra.mxu0 0.0
          %482 = vmatpush.xpose.msra.mxu0 0.0
          %483 = vmatpush.xpose.msra.mxu0 0.0
          %484 = vmatpush.xpose.msra.mxu0 0.0
          %485 = vmatpush.xpose.msra.mxu0 0.0
          %486 = vmatpush.xpose.msra.mxu0 %v469
          %487 = vmatmul.f32.gmra.mxu0 %v469
          %v488 = vpop.f32.mrf.mxu0
          %v489 = vadd.f32 0.0, %v488
          %490 = vdwg.mxu0
          %v491 = vld [vmem:[#allocation3] sm:$0xf]
          %v492 = vmul.f32 %v489, 0.00390625
          %v493 = vsub.f32 %v491, %v492
          %v494 = vmul.f32 %v493, 0.00390625
          %495 = vst.msk [vmem:[%s249] sm:$0xf] %vm364, %v494
          %v496 = vld [vmem:[#allocation5] sm:$0xf]
          %v498 = vsel %vm467, %v496, 0
          %500 = vmatpush.xpose.msra.mxu0 0.0
          %501 = vmatpush.xpose.msra.mxu0 0.0
          %502 = vmatpush.xpose.msra.mxu0 0.0
          %503 = vmatpush.xpose.msra.mxu0 0.0
          %504 = vmatpush.xpose.msra.mxu0 0.0
          %505 = vmatpush.xpose.msra.mxu0 0.0
          %506 = vmatpush.xpose.msra.mxu0 0.0
          %507 = vmatpush.xpose.msra.mxu0 0.0
          %508 = vmatpush.xpose.msra.mxu0 0.0
          %509 = vmatpush.xpose.msra.mxu0 0.0
          %510 = vmatpush.xpose.msra.mxu0 0.0
          %511 = vmatpush.xpose.msra.mxu0 0.0
          %512 = vmatpush.xpose.msra.mxu0 0.0
          %513 = vmatpush.xpose.msra.mxu0 0.0
          %514 = vmatpush.xpose.msra.mxu0 0.0
          %515 = vmatpush.xpose.msra.mxu0 %v498
          %516 = vmatmul.f32.gmra.mxu0 %v498
          %v517 = vpop.f32.mrf.mxu0
          %v518 = vadd.f32 0.0, %v517
          %519 = vdwg.mxu0
          %v520 = vld [vmem:[#allocation6] sm:$0xf]
          %v521 = vmul.f32 %v518, 0.00390625
          %v522 = vsub.f32 %v520, %v521
          %v523 = vmul.f32 %v522, 0.00390625
          %s524 = scalar_lea.vmem %s249, 4 [#allocation13]
          %525 = vst.msk [vmem:[%s524] sm:$0xf] %vm364, %v523
          %v526 = vld [vmem:[#allocation7] sm:$0xf]
          %v527 = vld [vmem:[#allocation5] sm:$0xf]
          %v528 = vmul.f32 %v527, 0.00390625
          %v529 = vadd.f32 %v526, %v528
          %530 = vst.msk [vmem:[%s261] sm:$0xf] %vm310, %v529
        $region48: #{tpu_custom_call.1} parent=27 // pred_fallthru
          _
        %s531 = sand.u32 %s100, 1
        %s532 = scalar_lea.sflag [#allocation10], %s531
        %s533 = sand.u32 %s100, 1
        %s534 = smul.addr %s533, 8
        %s535 = scalar_lea.vmem [#allocation13], %s534
        %p536 = scmp.lt.s32.totalorder %s28, 1
        %s537 = scalar_select %p536, %s28, 1
        %s538 = smul.addr %s537, 4
        %s539 = scalar_lea.vmem %s3, %s538
        // Predicated region
        $region49: #{tpu_custom_call.1} parent=27 // pred_check
          %p540 = pneg %p110
        $region50: #{tpu_custom_call.1} parent=27 // pred_check_branch
          %542 = sbr.rel (%p540) target = $region52
        $region51: #{tpu_custom_call.1} parent=27 // pred_region
          %544 = vsyncadd %s532, 0
          %s545 = smul.addr %s28, 4
          %s546 = scalar_lea.hbm %s2, %s545
          %s547 = sshll.u32 %s535, 4
          %s548 = int_to_ptr.vmem [resolvable:$true] %s547
          %s549 = sshll.u32 %s546, 4
          %s550 = int_to_ptr.hbm [resolvable:$true] %s549
          %555 = dma.vmem_to_hbm [thread:$0]  %s548, 128, %s550, %s532, 64, 128, 4
        $region52: #{tpu_custom_call.1} parent=27 // pred_fallthru
          _
        // Predicated region
        $region53: #{tpu_custom_call.1} parent=27 // pred_check
          %p556 = pneg %p136
        $region54: #{tpu_custom_call.1} parent=27 // pred_check_branch
          %558 = sbr.rel (%p556) target = $region56
        $region55: #{tpu_custom_call.1} parent=27 // pred_region
          _
        $region56: #{tpu_custom_call.1} parent=27 // pred_fallthru
          _
      $region28: #{tpu_custom_call.1} parent=5 // pred_fallthru
        _
      %p559 = scmp.le.s32.totalorder 2, %s19
      // Predicated region
      $region57: #{tpu_custom_call.1} parent=5 // pred_check
        %p560 = pneg %p559
      $region58: #{tpu_custom_call.1} parent=5 // pred_check_branch
        %562 = sbr.rel (%p560) target = $region60
      $region59: #{tpu_custom_call.1} parent=5 // pred_region
        %s563 = ssub.s32 %s19, 2
        // Predicated region
        $region61: #{tpu_custom_call.1} parent=59 // pred_check
          %p564 = pneg %p116
        $region62: #{tpu_custom_call.1} parent=59 // pred_check_branch
          %566 = sbr.rel (%p564) target = $region64
        $region63: #{tpu_custom_call.1} parent=59 // pred_region
          %s567 = sand.u32 %s101, 1
          %s568 = scalar_lea.sflag [#allocation10], %s567
          %s569 = sand.u32 %s101, 1
          %s570 = smul.addr %s569, 8
          %s571 = scalar_lea.vmem [#allocation13], %s570
          %573 = dma.done %s568, 128
        $region64: #{tpu_custom_call.1} parent=59 // pred_fallthru
          _
        // Predicated region
        $region65: #{tpu_custom_call.1} parent=59 // pred_check
          %p574 = pneg %p142
        $region66: #{tpu_custom_call.1} parent=59 // pred_check_branch
          %576 = sbr.rel (%p574) target = $region68
        $region67: #{tpu_custom_call.1} parent=59 // pred_region
          %p577 = scmp.lt.s32.totalorder %s30, 1
          %s578 = scalar_select %p577, %s30, 1
          %s579 = smul.addr %s578, 4
          %s580 = scalar_lea.vmem %s3, %s579
        $region68: #{tpu_custom_call.1} parent=59 // pred_fallthru
          _
      $region60: #{tpu_custom_call.1} parent=5 // pred_fallthru
        _
    $region6: #{tpu_custom_call.1} parent=1 // loop_footer
      %s23 = sadd.s32 1, %s19
    $region7: #{tpu_custom_call.1} parent=1 // loop_footer_branch
      %18 = sbr.rel target = $region3
    $region8: #{tpu_custom_call.1} parent=1 // loop_exit
      _
    %581 = vsyncpa [#allocation9], 1
    %s582 = scalar_lea.sflag [#allocation9], 1
    %583 = vsyncpa %s582, 1
    %584 = vsyncpa [#allocation12], 1
    %s585 = scalar_lea.sflag [#allocation12], 1
    %586 = vsyncpa %s585, 1
    %587 = vsyncpa [#allocation10], 1
    %s588 = scalar_lea.sflag [#allocation10], 1
    %589 = vsyncpa %s588, 1

</llo_original>
